<compile_context>
chip_gen: v7x
topology: tpu7x:2x2x1
jax: 0.10.0
libtpu: 0.0.40
codegen_flags: <defaults>
</compile_context>

<pallas_src>
import math
import functools

import jax
import jax.numpy as jnp
from jax.experimental import pallas as pl
from jax.experimental.pallas import tpu as pltpu

LOG_STD_MAX = 2.0
LOG_STD_MIN = -20.0


# ----------------------------------------------------------------------------
# Kernel
# ----------------------------------------------------------------------------
def _actor_kernel(num_hidden, action_dim, granule, deterministic, with_logprob,
                  *refs):
    """refs = [state, (w_h, b_h) * num_hidden, w_head, b_head,
               (eps if not deterministic), out]

    out tile is (tb, granule):
      lanes [0:action_dim)  -> tanh(u)            (action)
      lane  action_dim      -> logp (if with_logprob, else tanh(0)=0)
      remaining lanes       -> 0
    """
    idx = 0
    state_ref = refs[idx]; idx += 1
    hid_refs = []
    for _ in range(num_hidden):
        hid_refs.append((refs[idx], refs[idx + 1]))
        idx += 2
    w_head_ref, b_head_ref = refs[idx], refs[idx + 1]; idx += 2
    eps_ref = None
    if not deterministic:
        eps_ref = refs[idx]; idx += 1
    out_ref = refs[idx]

    # a_net: Linear + ReLU per layer (output_activation is also ReLU).
    h = state_ref[...]
    for w_ref, b_ref in hid_refs:
        h = jnp.maximum(
            jnp.dot(h, w_ref[...], preferred_element_type=jnp.float32)
            + b_ref[...],
            0.0,
        )

    # Fused, granule-padded mu / log_std head: one MXU pass, tile-aligned slices.
    head = (jnp.dot(h, w_head_ref[...], preferred_element_type=jnp.float32)
            + b_head_ref[...])
    mu = head[:, :granule]           # mu in lanes [0:A), zeros elsewhere
    log_std_raw = head[:, granule:]  # log_std in lanes [0:A), zeros elsewhere

    if deterministic:
        u = mu
        log_std = jnp.clip(log_std_raw, LOG_STD_MIN, LOG_STD_MAX)
        z2 = jnp.zeros_like(u)               # u == mu  =>  z == 0
    else:
        log_std = jnp.clip(log_std_raw, LOG_STD_MIN, LOG_STD_MAX)
        std = jnp.exp(log_std)
        eps = eps_ref[...]                   # zero-padded beyond action_dim
        u = mu + std * eps                   # reparameterized sample
        z2 = eps * eps                       # (u - mu)/std == eps exactly

    a = jnp.tanh(u)                          # padded lanes: tanh(0) = 0

    if not with_logprob:
        out_ref[...] = a
    else:
        # Normal(mu, std).log_prob(u) with tanh correction
        # (Appendix C of https://arxiv.org/pdf/1812.05905.pdf).
        log_prob = -0.5 * z2 - log_std - 0.5 * math.log(2.0 * math.pi)
        corr = 2.0 * (math.log(2.0) - u - jax.nn.softplus(-2.0 * u))
        lane = jax.lax.broadcasted_iota(jnp.int32, u.shape, 1)
        act_mask = lane < action_dim
        logp = jnp.sum(jnp.where(act_mask, log_prob - corr, 0.0),
                       axis=1, keepdims=True)
        # One unmasked lane-dense store: action lanes, logp lane, zeros.
        out_ref[...] = jnp.where(lane == action_dim, logp,
                                 jnp.where(act_mask, a, 0.0))


# ----------------------------------------------------------------------------
# Parameters
# ----------------------------------------------------------------------------
def init_actor_params(key, state_dim, action_dim, hid_shape, hid_layers):
    """PyTorch-Linear-style init (uniform +/- 1/sqrt(fan_in)).

    Also builds the fused, lane-granule-padded head ONCE here (not per call):
      w_head: [hidden, 2*G] with mu in lanes [0:A) of granule 0 and log_std in
      lanes [0:A) of granule 1, where G = 128 * ceil((A+1)/128) leaves room for
      the logp lane in the kernel's output slab.
    """
    layers = [state_dim] + list(hid_shape) * hid_layers

    def linear(key, fan_in, fan_out):
        k_w, k_b = jax.random.split(key)
        bound = 1.0 / math.sqrt(fan_in)
        w = jax.random.uniform(k_w, (fan_in, fan_out), jnp.float32, -bound, bound)
        b = jax.random.uniform(k_b, (1, fan_out), jnp.float32, -bound, bound)
        return w, b

    hidden = []
    for i in range(len(layers) - 1):
        key, sub = jax.random.split(key)
        hidden.append(linear(sub, layers[i], layers[i + 1]))
    key, k_mu = jax.random.split(key)
    key, k_ls = jax.random.split(key)
    mu_lin = linear(k_mu, layers[-1], action_dim)
    ls_lin = linear(k_ls, layers[-1], action_dim)

    granule = 128 * (-(-(action_dim + 1) // 128))
    hdim = layers[-1]
    w_head = jnp.zeros((hdim, 2 * granule), jnp.float32)
    w_head = w_head.at[:, :action_dim].set(mu_lin[0])
    w_head = w_head.at[:, granule:granule + action_dim].set(ls_lin[0])
    b_head = jnp.zeros((1, 2 * granule), jnp.float32)
    b_head = b_head.at[:, :action_dim].set(mu_lin[1])
    b_head = b_head.at[:, granule:granule + action_dim].set(ls_lin[1])

    return {"hidden": hidden, "mu": mu_lin, "log_std": ls_lin,
            "head": (w_head, b_head), "action_dim": action_dim,
            "head_granule": granule}


# ----------------------------------------------------------------------------
# Tiling
# ----------------------------------------------------------------------------
def _choose_tiling(batch):
    """Return (row_tile, padded_batch): large tiles, >=2 grid steps if possible."""
    pad8 = ((batch + 7) // 8) * 8
    if pad8 <= 512:
        if pad8 >= 16 and pad8 % 16 == 0:
            return pad8 // 2, pad8          # 2 steps -> feeds both v7x cores
        return pad8, pad8                   # tiny/odd batch: single full tile
    tb = 512
    padded = ((pad8 + tb - 1) // tb) * tb   # no tiny fallback tiles
    return tb, padded


# ----------------------------------------------------------------------------
# Forward wrapper
# ----------------------------------------------------------------------------
def actor_forward(params, state, eps=None, deterministic=False, with_logprob=True):
    """Pallas implementation of Actor.forward(state, deterministic, with_logprob)."""
    batch, state_dim = state.shape
    hidden = params["hidden"]
    num_hidden = len(hidden)
    w_head, b_head = params["head"]
    action_dim = params["action_dim"]
    granule = params["head_granule"]
    out_width = granule

    tb, padded_batch = _choose_tiling(batch)
    grid = (padded_batch // tb,)

    # Zero-pad streamed row operands to the padded batch (sliced back below).
    state = state.astype(jnp.float32)
    if padded_batch != batch:
        state_in = jnp.zeros((padded_batch, state_dim), jnp.float32)
        state_in = state_in.at[:batch].set(state)
    else:
        state_in = state

    inputs = [state_in]
    if not deterministic:
        if eps is None:
            raise ValueError("eps is required for the stochastic path")
        eps_in = jnp.zeros((padded_batch, granule), jnp.float32)
        eps_in = eps_in.at[:batch, :action_dim].set(eps.astype(jnp.float32))

    def row_spec(width):
        return pl.BlockSpec((tb, width), lambda i: (i, 0))

    def build_in_specs(use_buffer_hints):
        def resident(shape):
            if use_buffer_hints:
                # Weights never change across the grid -> single buffer.
                return pl.BlockSpec(shape, lambda i: (0, 0),
                                    pipeline_mode=pl.Buffered(1))
            return pl.BlockSpec(shape, lambda i: (0, 0))

        specs = [row_spec(state_dim)]
        for w, b in hidden:
            specs += [resident(w.shape), resident(b.shape)]
        specs += [resident(w_head.shape), resident(b_head.shape)]
        if not deterministic:
            specs.append(row_spec(granule))
        return specs

    for w, b in hidden:
        inputs += [w, b]
    inputs += [w_head, b_head]
    if not deterministic:
        inputs.append(eps_in)

    out_shape = jax.ShapeDtypeStruct((padded_batch, out_width), jnp.float32)
    out_spec = row_spec(out_width)

    # --- VMEM budget (explicit, v7x-safe) ------------------------------------
    weight_bytes = 4 * (sum(int(w.size) + int(b.size) for w, b in hidden)
                        + int(w_head.size) + int(b_head.size))
    stream_cols = state_dim + out_width + (0 if deterministic else granule)
    stream_bytes = 4 * tb * stream_cols * 2          # double-buffered row streams
    widths = [state_dim] + [int(w.shape[1]) for w, _ in hidden] + [2 * granule]
    scratch_bytes = 4 * tb * max(widths + [out_width]) * 4  # temporaries headroom
    vmem_needed = 2 * weight_bytes + stream_bytes + scratch_bytes + (2 << 20)
    vmem_limit = min(max(int(vmem_needed), 16 << 20), 64 << 20)

    # --- Cost estimate (advisory) --------------------------------------------
    flops = 2 * padded_batch * (
        sum(int(w.shape[0]) * int(w.shape[1]) for w, _ in hidden)
        + int(w_head.shape[0]) * int(w_head.shape[1]))
    trans_per_lane = 1 + (0 if deterministic else 1) + (2 if with_logprob else 0)
    transcendentals = padded_batch * action_dim * trans_per_lane
    bytes_accessed = (weight_bytes                     # resident weights: once
                      + 4 * padded_batch * (state_dim + out_width
                                            + (0 if deterministic else granule)))
    cost = pl.CostEstimate(flops=int(flops),
                           transcendentals=int(transcendentals),
                           bytes_accessed=int(bytes_accessed))

    kernel_fn = functools.partial(_actor_kernel, num_hidden, action_dim, granule,
                                  deterministic, with_logprob)

    out = None
    last_err = None
    for use_hints in (True, False):
        try:
            out = pl.pallas_call(
                kernel_fn,
                grid=grid,
                in_specs=build_in_specs(use_hints),
                out_specs=out_spec,
                out_shape=out_shape,
                compiler_params=pltpu.CompilerParams(
                    dimension_semantics=("parallel",),
                    vmem_limit_bytes=vmem_limit),
                cost_estimate=cost,
            )(*inputs)
            break
        except Exception as e:  # fallback if Buffered(1) hints are rejected
            last_err = e
            out = None
    if out is None:
        raise last_err

    a = out[:batch, :action_dim]
    logp = out[:batch, action_dim:action_dim + 1] if with_logprob else None
    return a, logp


# ----------------------------------------------------------------------------
# Pure-JAX reference
# ----------------------------------------------------------------------------
def actor_forward_ref(params, state, eps, deterministic, with_logprob):
    hp = jax.lax.Precision.HIGHEST
    h = state
    for w, b in params["hidden"]:
        h = jnp.maximum(jnp.dot(h, w, precision=hp) + b, 0.0)
    mu = jnp.dot(h, params["mu"][0], precision=hp) + params["mu"][1]
    log_std = jnp.clip(jnp.dot(h, params["log_std"][0], precision=hp)
                       + params["log_std"][1], LOG_STD_MIN, LOG_STD_MAX)
    std = jnp.exp(log_std)
    u = mu if deterministic else mu + std * eps
    a = jnp.tanh(u)
    if with_logprob:
        z = (u - mu) / std
        log_prob = -0.5 * z * z - log_std - 0.5 * jnp.log(2.0 * jnp.pi)
        corr = 2.0 * (jnp.log(2.0) - u - jax.nn.softplus(-2.0 * u))
        logp = jnp.sum(log_prob - corr, axis=1, keepdims=True)
    else:
        logp = None
    return a, logp


if __name__ == "__main__":
    # Small shapes consistent with the module: MLP on flat state vectors.
    batch = 8
    state_dim = 32
    action_dim = 8
    hid_shape = [32]
    hid_layers = 2

    key = jax.random.PRNGKey(0)
    key, k_params, k_state, k_eps = jax.random.split(key, 4)

    params = init_actor_params(k_params, state_dim, action_dim, hid_shape, hid_layers)
    state = jax.random.normal(k_state, (batch, state_dim), jnp.float32)
    eps = jax.random.normal(k_eps, (batch, action_dim), jnp.float32)

    # Stochastic path with log-prob (full kernel).
    a, logp = actor_forward(params, state, eps, deterministic=False, with_logprob=True)
    a = jax.block_until_ready(a)
    logp = jax.block_until_ready(logp)
    a_ref, logp_ref = actor_forward_ref(params, state, eps, False, True)
    assert a.shape == (batch, action_dim)
    assert logp.shape == (batch, 1)
    assert jnp.allclose(a, a_ref, rtol=1e-3, atol=1e-3)
    assert jnp.allclose(logp, logp_ref, rtol=1e-3, atol=1e-3)

    # Deterministic path (u = mu), no log-prob and no eps/sampling in-kernel.
    a_det, logp_none = actor_forward(params, state, deterministic=True,
                                     with_logprob=False)
    a_det = jax.block_until_ready(a_det)
    a_det_ref, _ = actor_forward_ref(params, state, eps, True, False)
    assert a_det.shape == (batch, action_dim)
    assert jnp.allclose(a_det, a_det_ref, rtol=1e-3, atol=1e-3)
    assert logp_none is None

    # Non-multiple-of-8 batch exercises the zero-row padding / tiling path.
    state5, eps5 = state[:5], eps[:5]
    a5, logp5 = actor_forward(params, state5, eps5, deterministic=False,
                              with_logprob=True)
    a5 = jax.block_until_ready(a5)
    a5_ref, logp5_ref = actor_forward_ref(params, state5, eps5, False, True)
    assert a5.shape == (5, action_dim) and logp5.shape == (5, 1)
    assert jnp.allclose(a5, a5_ref, rtol=1e-3, atol=1e-3)
    assert jnp.allclose(logp5, logp5_ref, rtol=1e-3, atol=1e-3)

    print("KERNEL_OK")
</pallas_src>

<mosaic_0001>
module attributes {stable_mosaic.version = 11 : i64} {
  func.func @_actor_kernel(%arg0: i32, %arg1: memref<8x32xf32, #tpu.memory_space<vmem>>, %arg2: memref<32x32xf32, #tpu.memory_space<vmem>>, %arg3: memref<1x32xf32, #tpu.memory_space<vmem>>, %arg4: memref<32x32xf32, #tpu.memory_space<vmem>>, %arg5: memref<1x32xf32, #tpu.memory_space<vmem>>, %arg6: memref<32x256xf32, #tpu.memory_space<vmem>>, %arg7: memref<1x256xf32, #tpu.memory_space<vmem>>, %arg8: memref<8x128xf32, #tpu.memory_space<vmem>>, %arg9: memref<8x128xf32, #tpu.memory_space<vmem>>) attributes {dimension_semantics = [#tpu.dimension_semantics<parallel>], iteration_bounds = array<i64: 1>, scalar_prefetch = 0 : i64, scratch_operands = 0 : i64, tpu.core_type = #tpu.core_type<tc>, window_params = [{transform_indices = @transform_0, window_bounds = array<i64: 8, 32>}, {pipeline_mode = #tpu.pipeline_mode<synchronous>, transform_indices = @transform_1, window_bounds = array<i64: 32, 32>}, {pipeline_mode = #tpu.pipeline_mode<synchronous>, transform_indices = @transform_2, window_bounds = array<i64: 1, 32>}, {pipeline_mode = #tpu.pipeline_mode<synchronous>, transform_indices = @transform_3, window_bounds = array<i64: 32, 32>}, {pipeline_mode = #tpu.pipeline_mode<synchronous>, transform_indices = @transform_4, window_bounds = array<i64: 1, 32>}, {pipeline_mode = #tpu.pipeline_mode<synchronous>, transform_indices = @transform_5, window_bounds = array<i64: 32, 256>}, {pipeline_mode = #tpu.pipeline_mode<synchronous>, transform_indices = @transform_6, window_bounds = array<i64: 1, 256>}, {transform_indices = @transform_7, window_bounds = array<i64: 8, 128>}, {transform_indices = @transform_8, window_bounds = array<i64: 8, 128>}]} {
    %c0 = arith.constant 0 : index
    %c0_0 = arith.constant 0 : index
    %0 = vector.load %arg1[%c0, %c0_0] : memref<8x32xf32, #tpu.memory_space<vmem>>, vector<8x32xf32>
    %c0_1 = arith.constant 0 : index
    %c0_2 = arith.constant 0 : index
    %1 = vector.load %arg2[%c0_1, %c0_2] : memref<32x32xf32, #tpu.memory_space<vmem>>, vector<32x32xf32>
    %cst = arith.constant dense<0.000000e+00> : vector<8x32xf32>
    %2 = tpu.matmul %0, %1, %cst {dimension_numbers = #tpu.dot_dimension_numbers<[1], [0], [0], [1], [0, 0, 1, 1], [], []>} : vector<8x32xf32>, vector<32x32xf32>, vector<8x32xf32> -> vector<8x32xf32>
    %c0_3 = arith.constant 0 : index
    %c0_4 = arith.constant 0 : index
    %3 = vector.load %arg3[%c0_3, %c0_4] : memref<1x32xf32, #tpu.memory_space<vmem>>, vector<1x32xf32>
    %4 = vector.broadcast %3 : vector<1x32xf32> to vector<8x32xf32>
    %5 = arith.addf %2, %4 : vector<8x32xf32>
    %cst_5 = arith.constant 0.000000e+00 : f32
    %6 = vector.broadcast %cst_5 : f32 to vector<8x32xf32>
    %7 = arith.maximumf %5, %6 : vector<8x32xf32>
    %c0_6 = arith.constant 0 : index
    %c0_7 = arith.constant 0 : index
    %8 = vector.load %arg4[%c0_6, %c0_7] : memref<32x32xf32, #tpu.memory_space<vmem>>, vector<32x32xf32>
    %cst_8 = arith.constant dense<0.000000e+00> : vector<8x32xf32>
    %9 = tpu.matmul %7, %8, %cst_8 {dimension_numbers = #tpu.dot_dimension_numbers<[1], [0], [0], [1], [0, 0, 1, 1], [], []>} : vector<8x32xf32>, vector<32x32xf32>, vector<8x32xf32> -> vector<8x32xf32>
    %c0_9 = arith.constant 0 : index
    %c0_10 = arith.constant 0 : index
    %10 = vector.load %arg5[%c0_9, %c0_10] : memref<1x32xf32, #tpu.memory_space<vmem>>, vector<1x32xf32>
    %11 = vector.broadcast %10 : vector<1x32xf32> to vector<8x32xf32>
    %12 = arith.addf %9, %11 : vector<8x32xf32>
    %cst_11 = arith.constant 0.000000e+00 : f32
    %13 = vector.broadcast %cst_11 : f32 to vector<8x32xf32>
    %14 = arith.maximumf %12, %13 : vector<8x32xf32>
    %c0_12 = arith.constant 0 : index
    %c0_13 = arith.constant 0 : index
    %15 = vector.load %arg6[%c0_12, %c0_13] : memref<32x256xf32, #tpu.memory_space<vmem>>, vector<32x256xf32>
    %cst_14 = arith.constant dense<0.000000e+00> : vector<8x256xf32>
    %16 = tpu.matmul %14, %15, %cst_14 {dimension_numbers = #tpu.dot_dimension_numbers<[1], [0], [0], [1], [0, 0, 1, 1], [], []>} : vector<8x32xf32>, vector<32x256xf32>, vector<8x256xf32> -> vector<8x256xf32>
    %c0_15 = arith.constant 0 : index
    %c0_16 = arith.constant 0 : index
    %17 = vector.load %arg7[%c0_15, %c0_16] : memref<1x256xf32, #tpu.memory_space<vmem>>, vector<1x256xf32>
    %18 = vector.broadcast %17 : vector<1x256xf32> to vector<8x256xf32>
    %19 = arith.addf %16, %18 : vector<8x256xf32>
    %20 = vector.extract_strided_slice %19 {offsets = [0, 0], sizes = [8, 128], strides = [1, 1]} : vector<8x256xf32> to vector<8x128xf32>
    %21 = vector.extract_strided_slice %19 {offsets = [0, 128], sizes = [8, 128], strides = [1, 1]} : vector<8x256xf32> to vector<8x128xf32>
    %cst_17 = arith.constant -2.000000e+01 : f32
    %cst_18 = arith.constant 2.000000e+00 : f32
    %22 = vector.broadcast %cst_17 : f32 to vector<8x128xf32>
    %23 = arith.maximumf %22, %21 : vector<8x128xf32>
    %24 = vector.broadcast %cst_18 : f32 to vector<8x128xf32>
    %25 = arith.minimumf %24, %23 : vector<8x128xf32>
    %26 = math.exp %25 : vector<8x128xf32>
    %c0_19 = arith.constant 0 : index
    %c0_20 = arith.constant 0 : index
    %27 = vector.load %arg8[%c0_19, %c0_20] : memref<8x128xf32, #tpu.memory_space<vmem>>, vector<8x128xf32>
    %28 = arith.mulf %26, %27 : vector<8x128xf32>
    %29 = arith.addf %20, %28 : vector<8x128xf32>
    %30 = arith.mulf %27, %27 : vector<8x128xf32>
    %31 = math.tanh %29 : vector<8x128xf32>
    %cst_21 = arith.constant -5.000000e-01 : f32
    %32 = vector.broadcast %cst_21 : f32 to vector<8x128xf32>
    %33 = arith.mulf %32, %30 : vector<8x128xf32>
    %34 = arith.subf %33, %25 : vector<8x128xf32>
    %cst_22 = arith.constant 0.918938517 : f32
    %35 = vector.broadcast %cst_22 : f32 to vector<8x128xf32>
    %36 = arith.subf %34, %35 : vector<8x128xf32>
    %cst_23 = arith.constant 0.693147182 : f32
    %37 = vector.broadcast %cst_23 : f32 to vector<8x128xf32>
    %38 = arith.subf %37, %29 : vector<8x128xf32>
    %cst_24 = arith.constant -2.000000e+00 : f32
    %39 = vector.broadcast %cst_24 : f32 to vector<8x128xf32>
    %40 = arith.mulf %39, %29 : vector<8x128xf32>
    %cst_25 = arith.constant 0.000000e+00 : f32
    %41 = vector.broadcast %cst_25 : f32 to vector<8x128xf32>
    %42 = arith.maximumf %40, %41 : vector<8x128xf32>
    %43 = vector.broadcast %cst_25 : f32 to vector<8x128xf32>
    %44 = arith.subf %40, %43 : vector<8x128xf32>
    %45 = arith.cmpf one, %44, %44 : vector<8x128xf32>
    %46 = vector.broadcast %cst_25 : f32 to vector<8x128xf32>
    %47 = arith.addf %40, %46 : vector<8x128xf32>
    %48 = math.absf %44 : vector<8x128xf32>
    %cst_26 = arith.constant 0.000000e+00 : f32
    %49 = vector.broadcast %cst_26 : f32 to vector<8x128xf32>
    %50 = arith.subf %49, %48 : vector<8x128xf32>
    %51 = math.exp %50 : vector<8x128xf32>
    %52 = math.log1p %51 : vector<8x128xf32>
    %53 = arith.addf %42, %52 : vector<8x128xf32>
    %54 = arith.select %45, %47, %53 : vector<8x128xi1>, vector<8x128xf32>
    %55 = arith.subf %38, %54 : vector<8x128xf32>
    %cst_27 = arith.constant 2.000000e+00 : f32
    %56 = vector.broadcast %cst_27 : f32 to vector<8x128xf32>
    %57 = arith.mulf %56, %55 : vector<8x128xf32>
    %58 = tpu.iota {dimensions = array<i32: 1>} : vector<8x128xi32>
    %c8_i32 = arith.constant 8 : i32
    %59 = vector.broadcast %c8_i32 : i32 to vector<8x128xi32>
    %60 = arith.cmpi slt, %58, %59 : vector<8x128xi32>
    %61 = arith.subf %36, %57 : vector<8x128xf32>
    %cst_28 = arith.constant 0.000000e+00 : f32
    %62 = vector.broadcast %cst_28 : f32 to vector<8x128xf32>
    %63 = arith.select %60, %61, %62 : vector<8x128xi1>, vector<8x128xf32>
    %cst_29 = arith.constant dense<0.000000e+00> : vector<8xf32>
    %64 = vector.multi_reduction <add>, %63, %cst_29 [1] : vector<8x128xf32> to vector<8xf32>
    %65 = vector.shape_cast %64 : vector<8xf32> to vector<8x1xf32>
    %c8_i32_30 = arith.constant 8 : i32
    %66 = vector.broadcast %c8_i32_30 : i32 to vector<8x128xi32>
    %67 = arith.cmpi eq, %58, %66 : vector<8x128xi32>
    %cst_31 = arith.constant 0.000000e+00 : f32
    %68 = vector.broadcast %cst_31 : f32 to vector<8x128xf32>
    %69 = arith.select %60, %31, %68 : vector<8x128xi1>, vector<8x128xf32>
    %70 = vector.shape_cast %65 : vector<8x1xf32> to vector<8x1xf32>
    %71 = vector.broadcast %70 : vector<8x1xf32> to vector<8x128xf32>
    %72 = arith.select %67, %71, %69 : vector<8x128xi1>, vector<8x128xf32>
    %c0_32 = arith.constant 0 : index
    %c0_33 = arith.constant 0 : index
    %73 = vector.load %arg9[%c0_32, %c0_33] : memref<8x128xf32, #tpu.memory_space<vmem>>, vector<8x128xf32>
    tpu.vector_store %arg9[%c0_32, %c0_33], %72 {strides = array<i32>} : memref<8x128xf32, #tpu.memory_space<vmem>>, vector<8x128xf32>,
    return
  }
  func.func @transform_0(%arg0: i32) -> (i32, i32) {
    %c0_i32 = arith.constant 0 : i32
    %c0_i32_0 = arith.constant 0 : i32
    return %arg0, %c0_i32 : i32, i32
  }
  func.func @transform_1(%arg0: i32) -> (i32, i32) {
    %c0_i32 = arith.constant 0 : i32
    %c0_i32_0 = arith.constant 0 : i32
    %c0_i32_1 = arith.constant 0 : i32
    return %c0_i32, %c0_i32_0 : i32, i32
  }
  func.func @transform_2(%arg0: i32) -> (i32, i32) {
    %c0_i32 = arith.constant 0 : i32
    %c0_i32_0 = arith.constant 0 : i32
    %c0_i32_1 = arith.constant 0 : i32
    return %c0_i32, %c0_i32_0 : i32, i32
  }
  func.func @transform_3(%arg0: i32) -> (i32, i32) {
    %c0_i32 = arith.constant 0 : i32
    %c0_i32_0 = arith.constant 0 : i32
    %c0_i32_1 = arith.constant 0 : i32
    return %c0_i32, %c0_i32_0 : i32, i32
  }
  func.func @transform_4(%arg0: i32) -> (i32, i32) {
    %c0_i32 = arith.constant 0 : i32
    %c0_i32_0 = arith.constant 0 : i32
    %c0_i32_1 = arith.constant 0 : i32
    return %c0_i32, %c0_i32_0 : i32, i32
  }
  func.func @transform_5(%arg0: i32) -> (i32, i32) {
    %c0_i32 = arith.constant 0 : i32
    %c0_i32_0 = arith.constant 0 : i32
    %c0_i32_1 = arith.constant 0 : i32
    return %c0_i32, %c0_i32_0 : i32, i32
  }
  func.func @transform_6(%arg0: i32) -> (i32, i32) {
    %c0_i32 = arith.constant 0 : i32
    %c0_i32_0 = arith.constant 0 : i32
    %c0_i32_1 = arith.constant 0 : i32
    return %c0_i32, %c0_i32_0 : i32, i32
  }
  func.func @transform_7(%arg0: i32) -> (i32, i32) {
    %c0_i32 = arith.constant 0 : i32
    %c0_i32_0 = arith.constant 0 : i32
    return %arg0, %c0_i32 : i32, i32
  }
  func.func @transform_8(%arg0: i32) -> (i32, i32) {
    %c0_i32 = arith.constant 0 : i32
    %c0_i32_0 = arith.constant 0 : i32
    return %arg0, %c0_i32 : i32, i32
  }
}

module attributes {stable_mosaic.version = 11 : i64} {
  func.func @_actor_kernel(%arg0: i32, %arg1: memref<8x32xf32, #tpu.memory_space<vmem>>, %arg2: memref<32x32xf32, #tpu.memory_space<vmem>>, %arg3: memref<1x32xf32, #tpu.memory_space<vmem>>, %arg4: memref<32x32xf32, #tpu.memory_space<vmem>>, %arg5: memref<1x32xf32, #tpu.memory_space<vmem>>, %arg6: memref<32x256xf32, #tpu.memory_space<vmem>>, %arg7: memref<1x256xf32, #tpu.memory_space<vmem>>, %arg8: memref<8x128xf32, #tpu.memory_space<vmem>>, %arg9: memref<8x128xf32, #tpu.memory_space<vmem>>) attributes {dimension_semantics = [#tpu.dimension_semantics<parallel>], iteration_bounds = array<i64: 1>, scalar_prefetch = 0 : i64, scratch_operands = 0 : i64, tpu.core_type = #tpu.core_type<tc>, window_params = [{transform_indices = @transform_0, window_bounds = array<i64: 8, 32>}, {pipeline_mode = #tpu.pipeline_mode<synchronous>, transform_indices = @transform_1, window_bounds = array<i64: 32, 32>}, {pipeline_mode = #tpu.pipeline_mode<synchronous>, transform_indices = @transform_2, window_bounds = array<i64: 1, 32>}, {pipeline_mode = #tpu.pipeline_mode<synchronous>, transform_indices = @transform_3, window_bounds = array<i64: 32, 32>}, {pipeline_mode = #tpu.pipeline_mode<synchronous>, transform_indices = @transform_4, window_bounds = array<i64: 1, 32>}, {pipeline_mode = #tpu.pipeline_mode<synchronous>, transform_indices = @transform_5, window_bounds = array<i64: 32, 256>}, {pipeline_mode = #tpu.pipeline_mode<synchronous>, transform_indices = @transform_6, window_bounds = array<i64: 1, 256>}, {transform_indices = @transform_7, window_bounds = array<i64: 8, 128>}, {transform_indices = @transform_8, window_bounds = array<i64: 8, 128>}]} {
    %c0 = arith.constant 0 : index
    %c0_0 = arith.constant 0 : index
    %0 = vector.load %arg1[%c0, %c0_0] : memref<8x32xf32, #tpu.memory_space<vmem>>, vector<8x32xf32>
    %c0_1 = arith.constant 0 : index
    %c0_2 = arith.constant 0 : index
    %1 = vector.load %arg2[%c0_1, %c0_2] : memref<32x32xf32, #tpu.memory_space<vmem>>, vector<32x32xf32>
    %cst = arith.constant dense<0.000000e+00> : vector<8x32xf32>
    %2 = tpu.matmul %0, %1, %cst {dimension_numbers = #tpu.dot_dimension_numbers<[1], [0], [0], [1], [0, 0, 1, 1], [], []>} : vector<8x32xf32>, vector<32x32xf32>, vector<8x32xf32> -> vector<8x32xf32>
    %c0_3 = arith.constant 0 : index
    %c0_4 = arith.constant 0 : index
    %3 = vector.load %arg3[%c0_3, %c0_4] : memref<1x32xf32, #tpu.memory_space<vmem>>, vector<1x32xf32>
    %4 = vector.broadcast %3 : vector<1x32xf32> to vector<8x32xf32>
    %5 = arith.addf %2, %4 : vector<8x32xf32>
    %cst_5 = arith.constant 0.000000e+00 : f32
    %6 = vector.broadcast %cst_5 : f32 to vector<8x32xf32>
    %7 = arith.maximumf %5, %6 : vector<8x32xf32>
    %c0_6 = arith.constant 0 : index
    %c0_7 = arith.constant 0 : index
    %8 = vector.load %arg4[%c0_6, %c0_7] : memref<32x32xf32, #tpu.memory_space<vmem>>, vector<32x32xf32>
    %cst_8 = arith.constant dense<0.000000e+00> : vector<8x32xf32>
    %9 = tpu.matmul %7, %8, %cst_8 {dimension_numbers = #tpu.dot_dimension_numbers<[1], [0], [0], [1], [0, 0, 1, 1], [], []>} : vector<8x32xf32>, vector<32x32xf32>, vector<8x32xf32> -> vector<8x32xf32>
    %c0_9 = arith.constant 0 : index
    %c0_10 = arith.constant 0 : index
    %10 = vector.load %arg5[%c0_9, %c0_10] : memref<1x32xf32, #tpu.memory_space<vmem>>, vector<1x32xf32>
    %11 = vector.broadcast %10 : vector<1x32xf32> to vector<8x32xf32>
    %12 = arith.addf %9, %11 : vector<8x32xf32>
    %cst_11 = arith.constant 0.000000e+00 : f32
    %13 = vector.broadcast %cst_11 : f32 to vector<8x32xf32>
    %14 = arith.maximumf %12, %13 : vector<8x32xf32>
    %c0_12 = arith.constant 0 : index
    %c0_13 = arith.constant 0 : index
    %15 = vector.load %arg6[%c0_12, %c0_13] : memref<32x256xf32, #tpu.memory_space<vmem>>, vector<32x256xf32>
    %cst_14 = arith.constant dense<0.000000e+00> : vector<8x256xf32>
    %16 = tpu.matmul %14, %15, %cst_14 {dimension_numbers = #tpu.dot_dimension_numbers<[1], [0], [0], [1], [0, 0, 1, 1], [], []>} : vector<8x32xf32>, vector<32x256xf32>, vector<8x256xf32> -> vector<8x256xf32>
    %c0_15 = arith.constant 0 : index
    %c0_16 = arith.constant 0 : index
    %17 = vector.load %arg7[%c0_15, %c0_16] : memref<1x256xf32, #tpu.memory_space<vmem>>, vector<1x256xf32>
    %18 = vector.broadcast %17 : vector<1x256xf32> to vector<8x256xf32>
    %19 = arith.addf %16, %18 : vector<8x256xf32>
    %20 = vector.extract_strided_slice %19 {offsets = [0, 0], sizes = [8, 128], strides = [1, 1]} : vector<8x256xf32> to vector<8x128xf32>
    %21 = vector.extract_strided_slice %19 {offsets = [0, 128], sizes = [8, 128], strides = [1, 1]} : vector<8x256xf32> to vector<8x128xf32>
    %cst_17 = arith.constant -2.000000e+01 : f32
    %cst_18 = arith.constant 2.000000e+00 : f32
    %22 = vector.broadcast %cst_17 : f32 to vector<8x128xf32>
    %23 = arith.maximumf %22, %21 : vector<8x128xf32>
    %24 = vector.broadcast %cst_18 : f32 to vector<8x128xf32>
    %25 = arith.minimumf %24, %23 : vector<8x128xf32>
    %26 = math.exp %25 : vector<8x128xf32>
    %c0_19 = arith.constant 0 : index
    %c0_20 = arith.constant 0 : index
    %27 = vector.load %arg8[%c0_19, %c0_20] : memref<8x128xf32, #tpu.memory_space<vmem>>, vector<8x128xf32>
    %28 = arith.mulf %26, %27 : vector<8x128xf32>
    %29 = arith.addf %20, %28 : vector<8x128xf32>
    %30 = arith.mulf %27, %27 : vector<8x128xf32>
    %31 = math.tanh %29 : vector<8x128xf32>
    %cst_21 = arith.constant -5.000000e-01 : f32
    %32 = vector.broadcast %cst_21 : f32 to vector<8x128xf32>
    %33 = arith.mulf %32, %30 : vector<8x128xf32>
    %34 = arith.subf %33, %25 : vector<8x128xf32>
    %cst_22 = arith.constant 0.918938517 : f32
    %35 = vector.broadcast %cst_22 : f32 to vector<8x128xf32>
    %36 = arith.subf %34, %35 : vector<8x128xf32>
    %cst_23 = arith.constant 0.693147182 : f32
    %37 = vector.broadcast %cst_23 : f32 to vector<8x128xf32>
    %38 = arith.subf %37, %29 : vector<8x128xf32>
    %cst_24 = arith.constant -2.000000e+00 : f32
    %39 = vector.broadcast %cst_24 : f32 to vector<8x128xf32>
    %40 = arith.mulf %39, %29 : vector<8x128xf32>
    %cst_25 = arith.constant 0.000000e+00 : f32
    %41 = vector.broadcast %cst_25 : f32 to vector<8x128xf32>
    %42 = arith.maximumf %40, %41 : vector<8x128xf32>
    %43 = vector.broadcast %cst_25 : f32 to vector<8x128xf32>
    %44 = arith.subf %40, %43 : vector<8x128xf32>
    %45 = arith.cmpf one, %44, %44 : vector<8x128xf32>
    %46 = vector.broadcast %cst_25 : f32 to vector<8x128xf32>
    %47 = arith.addf %40, %46 : vector<8x128xf32>
    %48 = math.absf %44 : vector<8x128xf32>
    %cst_26 = arith.constant 0.000000e+00 : f32
    %49 = vector.broadcast %cst_26 : f32 to vector<8x128xf32>
    %50 = arith.subf %49, %48 : vector<8x128xf32>
    %51 = math.exp %50 : vector<8x128xf32>
    %52 = math.log1p %51 : vector<8x128xf32>
    %53 = arith.addf %42, %52 : vector<8x128xf32>
    %54 = arith.select %45, %47, %53 : vector<8x128xi1>, vector<8x128xf32>
    %55 = arith.subf %38, %54 : vector<8x128xf32>
    %cst_27 = arith.constant 2.000000e+00 : f32
    %56 = vector.broadcast %cst_27 : f32 to vector<8x128xf32>
    %57 = arith.mulf %56, %55 : vector<8x128xf32>
    %58 = tpu.iota {dimensions = array<i32: 1>} : vector<8x128xi32>
    %c8_i32 = arith.constant 8 : i32
    %59 = vector.broadcast %c8_i32 : i32 to vector<8x128xi32>
    %60 = arith.cmpi slt, %58, %59 : vector<8x128xi32>
    %61 = arith.subf %36, %57 : vector<8x128xf32>
    %cst_28 = arith.constant 0.000000e+00 : f32
    %62 = vector.broadcast %cst_28 : f32 to vector<8x128xf32>
    %63 = arith.select %60, %61, %62 : vector<8x128xi1>, vector<8x128xf32>
    %cst_29 = arith.constant dense<0.000000e+00> : vector<8xf32>
    %64 = vector.multi_reduction <add>, %63, %cst_29 [1] : vector<8x128xf32> to vector<8xf32>
    %65 = vector.shape_cast %64 : vector<8xf32> to vector<8x1xf32>
    %c8_i32_30 = arith.constant 8 : i32
    %66 = vector.broadcast %c8_i32_30 : i32 to vector<8x128xi32>
    %67 = arith.cmpi eq, %58, %66 : vector<8x128xi32>
    %cst_31 = arith.constant 0.000000e+00 : f32
    %68 = vector.broadcast %cst_31 : f32 to vector<8x128xf32>
    %69 = arith.select %60, %31, %68 : vector<8x128xi1>, vector<8x128xf32>
    %70 = vector.shape_cast %65 : vector<8x1xf32> to vector<8x1xf32>
    %71 = vector.broadcast %70 : vector<8x1xf32> to vector<8x128xf32>
    %72 = arith.select %67, %71, %69 : vector<8x128xi1>, vector<8x128xf32>
    %c0_32 = arith.constant 0 : index
    %c0_33 = arith.constant 0 : index
    %73 = vector.load %arg9[%c0_32, %c0_33] : memref<8x128xf32, #tpu.memory_space<vmem>>, vector<8x128xf32>
    tpu.vector_store %arg9[%c0_32, %c0_33], %72 {strides = array<i32>} : memref<8x128xf32, #tpu.memory_space<vmem>>, vector<8x128xf32>,
    return
  }
  func.func @transform_0(%arg0: i32) -> (i32, i32) {
    %c0_i32 = arith.constant 0 : i32
    %c0_i32_0 = arith.constant 0 : i32
    return %arg0, %c0_i32 : i32, i32
  }
  func.func @transform_1(%arg0: i32) -> (i32, i32) {
    %c0_i32 = arith.constant 0 : i32
    %c0_i32_0 = arith.constant 0 : i32
    %c0_i32_1 = arith.constant 0 : i32
    return %c0_i32, %c0_i32_0 : i32, i32
  }
  func.func @transform_2(%arg0: i32) -> (i32, i32) {
    %c0_i32 = arith.constant 0 : i32
    %c0_i32_0 = arith.constant 0 : i32
    %c0_i32_1 = arith.constant 0 : i32
    return %c0_i32, %c0_i32_0 : i32, i32
  }
  func.func @transform_3(%arg0: i32) -> (i32, i32) {
    %c0_i32 = arith.constant 0 : i32
    %c0_i32_0 = arith.constant 0 : i32
    %c0_i32_1 = arith.constant 0 : i32
    return %c0_i32, %c0_i32_0 : i32, i32
  }
  func.func @transform_4(%arg0: i32) -> (i32, i32) {
    %c0_i32 = arith.constant 0 : i32
    %c0_i32_0 = arith.constant 0 : i32
    %c0_i32_1 = arith.constant 0 : i32
    return %c0_i32, %c0_i32_0 : i32, i32
  }
  func.func @transform_5(%arg0: i32) -> (i32, i32) {
    %c0_i32 = arith.constant 0 : i32
    %c0_i32_0 = arith.constant 0 : i32
    %c0_i32_1 = arith.constant 0 : i32
    return %c0_i32, %c0_i32_0 : i32, i32
  }
  func.func @transform_6(%arg0: i32) -> (i32, i32) {
    %c0_i32 = arith.constant 0 : i32
    %c0_i32_0 = arith.constant 0 : i32
    %c0_i32_1 = arith.constant 0 : i32
    return %c0_i32, %c0_i32_0 : i32, i32
  }
  func.func @transform_7(%arg0: i32) -> (i32, i32) {
    %c0_i32 = arith.constant 0 : i32
    %c0_i32_0 = arith.constant 0 : i32
    return %arg0, %c0_i32 : i32, i32
  }
  func.func @transform_8(%arg0: i32) -> (i32, i32) {
    %c0_i32 = arith.constant 0 : i32
    %c0_i32_0 = arith.constant 0 : i32
    return %arg0, %c0_i32 : i32, i32
  }
}

</mosaic_0001>

<llo_original>
// kernel: tpu_custom_call.1
$region0: #{tpu_custom_call.1}
  #allocation0 [shape = 'u32[]', space=smem, size = 0x4, offset = 0x4, fixed_abs, tag = 'smem constant byte address 0x4 - core index']
  #allocation1 [shape = 'u32[144,128]{1,0:T(1,128)}', space=vmem, size = 0x12000, scoped, tag = 'internal scratch']
  %s0 = inlined_call_operand.hbm [shape: f32[8,32], index: 0, kind: input, shape index: {}]
  %s1 = inlined_call_operand.hbm [shape: f32[32,32], index: 1, kind: input, shape index: {}]
  %s2 = inlined_call_operand.vmem [shape: f32[1,32], index: 2, kind: input, shape index: {}]
  %s3 = inlined_call_operand.hbm [shape: f32[32,32], index: 3, kind: input, shape index: {}]
  %s4 = inlined_call_operand.vmem [shape: f32[1,32], index: 4, kind: input, shape index: {}]
  %s5 = inlined_call_operand.hbm [shape: f32[32,256], index: 5, kind: input, shape index: {}]
  %s6 = inlined_call_operand.vmem [shape: f32[1,256], index: 6, kind: input, shape index: {}]
  %s7 = inlined_call_operand.vmem [shape: f32[8,128], index: 7, kind: input, shape index: {}]
  %s8 = inlined_call_operand.hbm [shape: f32[8,128], index: 8, kind: output, shape index: {}]
  %s9 = sld [smem:[#allocation0]]
  $region58: #{tpu_custom_call.1} parent=0
    _
  %s11 = ssub.s32 1, %s9
  %s12 = scalar_select 0, %s11, %s9
  $region1: #{tpu_custom_call.1} parent=0
    #allocation2 [shape = 'u8[4096]{0}', space=vmem, size = 0x1000, scoped, tag = 'input window, operand 0, single buffered']
    #allocation3 [shape = 's32[1]{0}', space=sflag, size = 0x4, scoped, tag = 'scoped memory for tpu_custom_call.1']
    #allocation4 [shape = 's32[1]{0}', space=sflag, size = 0x4, scoped, tag = 'scoped memory for tpu_custom_call.1']
    #allocation5 [shape = 'u8[16384]{0}', space=vmem, size = 0x4000, scoped, tag = 'input window, operand 1, single buffered']
    #allocation6 [shape = 's32[1]{0}', space=sflag, size = 0x4, scoped, tag = 'scoped memory for tpu_custom_call.1']
    #allocation7 [shape = 'u8[16384]{0}', space=vmem, size = 0x4000, scoped, tag = 'input window, operand 3, single buffered']
    #allocation8 [shape = 'u8[32768]{0}', space=vmem, size = 0x8000, scoped, tag = 'input window, operand 5, single buffered']
    #allocation9 [shape = 's32[1]{0}', space=sflag, size = 0x4, scoped, tag = 'scoped memory for tpu_custom_call.1']
    #allocation10 [shape = 'u8[4096]{0}', space=vmem, size = 0x1000, scoped, tag = 'output window, operand 0, single buffered']
    %13 = vsyncpa [#allocation3], 0
    %14 = vsyncpa [#allocation6], 0
    %15 = vsyncpa [#allocation9], 0
    %16 = vsyncpa [#allocation4], 0
    // Predicated region
    $region2: #{tpu_custom_call.1} parent=1 // pred_check
      _
    $region3: #{tpu_custom_call.1} parent=1 // pred_check_branch
      %18 = sbr.rel (0) target = $region5
    $region4: #{tpu_custom_call.1} parent=1 // pred_region
      %s20 = ssub.s32 128, 128
      %21 = vsyncadd [#allocation3], %s20
      %s23 = sshll.u32 [#allocation2], 4
      %s24 = int_to_ptr.vmem [resolvable:$true] %s23
      %26 = dma.hbm_to_vmem [thread:$0]  %s0, 128, %s24, [#allocation3]
    $region5: #{tpu_custom_call.1} parent=1 // pred_fallthru
      _
    // Predicated region
    $region6: #{tpu_custom_call.1} parent=1 // pred_check
      _
    $region7: #{tpu_custom_call.1} parent=1 // pred_check_branch
      %28 = sbr.rel (0) target = $region9
    $region8: #{tpu_custom_call.1} parent=1 // pred_region
      %s30 = ssub.s32 512, 512
      %31 = vsyncadd [#allocation6], %s30
      %s32 = sshll.u32 [#allocation5], 4
      %s33 = int_to_ptr.vmem [resolvable:$true] %s32
      %38 = dma.hbm_to_vmem [thread:$0]  %s1, 512, %s33, [#allocation6], 128, 128, 8
    $region9: #{tpu_custom_call.1} parent=1 // pred_fallthru
      _
    // Predicated region
    $region10: #{tpu_custom_call.1} parent=1 // pred_check
      _
    $region11: #{tpu_custom_call.1} parent=1 // pred_check_branch
      %40 = sbr.rel (0) target = $region13
    $region12: #{tpu_custom_call.1} parent=1 // pred_region
      _
    $region13: #{tpu_custom_call.1} parent=1 // pred_fallthru
      _
    // Predicated region
    $region14: #{tpu_custom_call.1} parent=1 // pred_check
      _
    $region15: #{tpu_custom_call.1} parent=1 // pred_check_branch
      %42 = sbr.rel (0) target = $region17
    $region16: #{tpu_custom_call.1} parent=1 // pred_region
      %s44 = ssub.s32 512, 512
      %45 = vsyncadd [#allocation6], %s44
      %s46 = sshll.u32 [#allocation7], 4
      %s47 = int_to_ptr.vmem [resolvable:$true] %s46
      %52 = dma.hbm_to_vmem [thread:$0]  %s3, 512, %s47, [#allocation6], 128, 128, 8
    $region17: #{tpu_custom_call.1} parent=1 // pred_fallthru
      _
    // Predicated region
    $region18: #{tpu_custom_call.1} parent=1 // pred_check
      _
    $region19: #{tpu_custom_call.1} parent=1 // pred_check_branch
      %54 = sbr.rel (0) target = $region21
    $region20: #{tpu_custom_call.1} parent=1 // pred_region
      _
    $region21: #{tpu_custom_call.1} parent=1 // pred_fallthru
      _
    // Predicated region
    $region22: #{tpu_custom_call.1} parent=1 // pred_check
      _
    $region23: #{tpu_custom_call.1} parent=1 // pred_check_branch
      %56 = sbr.rel (0) target = $region25
    $region24: #{tpu_custom_call.1} parent=1 // pred_region
      %s58 = ssub.s32 1024, 1024
      %59 = vsyncadd [#allocation9], %s58
      %s60 = sshll.u32 [#allocation8], 4
      %s61 = int_to_ptr.vmem [resolvable:$true] %s60
      %66 = dma.hbm_to_vmem [thread:$0]  %s5, 1024, %s61, [#allocation9], 256, 256, 16
    $region25: #{tpu_custom_call.1} parent=1 // pred_fallthru
      _
    // Predicated region
    $region26: #{tpu_custom_call.1} parent=1 // pred_check
      _
    $region27: #{tpu_custom_call.1} parent=1 // pred_check_branch
      %68 = sbr.rel (0) target = $region29
    $region28: #{tpu_custom_call.1} parent=1 // pred_region
      _
    $region29: #{tpu_custom_call.1} parent=1 // pred_fallthru
      _
    // Predicated region
    $region30: #{tpu_custom_call.1} parent=1 // pred_check
      _
    $region31: #{tpu_custom_call.1} parent=1 // pred_check_branch
      %70 = sbr.rel (0) target = $region33
    $region32: #{tpu_custom_call.1} parent=1 // pred_region
      _
    $region33: #{tpu_custom_call.1} parent=1 // pred_fallthru
      _
    // Predicated region
    $region34: #{tpu_custom_call.1} parent=1 // pred_check
      _
    $region35: #{tpu_custom_call.1} parent=1 // pred_check_branch
      %72 = sbr.rel (0) target = $region37
    $region36: #{tpu_custom_call.1} parent=1 // pred_region
      %73 = dma.done [#allocation3], 128
    $region37: #{tpu_custom_call.1} parent=1 // pred_fallthru
      _
    // Predicated region
    $region38: #{tpu_custom_call.1} parent=1 // pred_check
      _
    $region39: #{tpu_custom_call.1} parent=1 // pred_check_branch
      %75 = sbr.rel (0) target = $region41
    $region40: #{tpu_custom_call.1} parent=1 // pred_region
      %76 = dma.done [#allocation6], 512
    $region41: #{tpu_custom_call.1} parent=1 // pred_fallthru
      _
    // Predicated region
    $region42: #{tpu_custom_call.1} parent=1 // pred_check
      _
    $region43: #{tpu_custom_call.1} parent=1 // pred_check_branch
      %78 = sbr.rel (0) target = $region45
    $region44: #{tpu_custom_call.1} parent=1 // pred_region
      %79 = dma.done [#allocation6], 512
    $region45: #{tpu_custom_call.1} parent=1 // pred_fallthru
      _
    // Predicated region
    $region46: #{tpu_custom_call.1} parent=1 // pred_check
      _
    $region47: #{tpu_custom_call.1} parent=1 // pred_check_branch
      %81 = sbr.rel (0) target = $region49
    $region48: #{tpu_custom_call.1} parent=1 // pred_region
      %82 = dma.done [#allocation9], 1024
    $region49: #{tpu_custom_call.1} parent=1 // pred_fallthru
      _
    %v83 = vld [vmem:[#allocation2] sm:$0xff]
    %v84 = vld [vmem:[#allocation5] sm:$0xff]
    %v85 = vld [vmem:[#allocation5 + $0x8] sm:$0xff]
    %v86 = vld [vmem:[#allocation5 + $0x10] sm:$0xff]
    %v87 = vld [vmem:[#allocation5 + $0x18] sm:$0xff]
    %v88 = vld [vmem:[%s2] sm:$0x1]
    %v90 = vlaneseq
    %v91 = vshrl.u32 %v90, 7
    %v92 = vsub.s32 0, %v91
    %v93 = vrot.slane %v88, %v92
    %vm95 = vcmask 261120
    %v97 = vsel %vm95, %v83, 0
    %99 = vmatprep.subr.mxu0 0.0
    %100 = vmatpush1.msra.mxu0 %v84
    %101 = vmatprep.subr.mxu0 0.0
    %102 = vmatpush1.msra.mxu0 %v85
    %103 = vmatprep.subr.mxu0 0.0
    %104 = vmatpush1.msra.mxu0 %v86
    %105 = vmatprep.subr.mxu0 0.0
    %106 = vmatpush1.msra.mxu0 %v87
    %107 = vmatprep.subr.mxu0 0.0
    %108 = vmatpush1.msra.mxu0 0.0
    %109 = vmatprep.subr.mxu0 0.0
    %110 = vmatpush1.msra.mxu0 0.0
    %111 = vmatprep.subr.mxu0 0.0
    %112 = vmatpush1.msra.mxu0 0.0
    %113 = vmatprep.subr.mxu0 0.0
    %114 = vmatpush1.msra.mxu0 0.0
    %115 = vmatprep.subr.mxu0 0.0
    %116 = vmatpush1.msra.mxu0 0.0
    %117 = vmatprep.subr.mxu0 0.0
    %118 = vmatpush1.msra.mxu0 0.0
    %119 = vmatprep.subr.mxu0 0.0
    %120 = vmatpush1.msra.mxu0 0.0
    %121 = vmatprep.subr.mxu0 0.0
    %122 = vmatpush1.msra.mxu0 0.0
    %123 = vmatprep.subr.mxu0 0.0
    %124 = vmatpush1.msra.mxu0 0.0
    %125 = vmatprep.subr.mxu0 0.0
    %126 = vmatpush1.msra.mxu0 0.0
    %127 = vmatprep.subr.mxu0 0.0
    %128 = vmatpush1.msra.mxu0 0.0
    %129 = vmatprep.subr.mxu0 0.0
    %130 = vmatpush1.msra.mxu0 0.0
    %131 = vmatprep.subr.mxu0 0.0
    %132 = vmatpush1.msra.mxu0 0.0
    %133 = vmatprep.subr.mxu0 0.0
    %134 = vmatpush1.msra.mxu0 0.0
    %135 = vmatprep.subr.mxu0 0.0
    %136 = vmatpush1.msra.mxu0 0.0
    %137 = vmatprep.subr.mxu0 0.0
    %138 = vmatpush1.msra.mxu0 0.0
    %139 = vmatprep.subr.mxu0 0.0
    %140 = vmatpush1.msra.mxu0 0.0
    %141 = vmatprep.subr.mxu0 0.0
    %142 = vmatpush1.msra.mxu0 0.0
    %143 = vmatprep.subr.mxu0 0.0
    %144 = vmatpush1.msra.mxu0 0.0
    %145 = vmatprep.subr.mxu0 0.0
    %146 = vmatpush1.msra.mxu0 0.0
    %147 = vmatprep.subr.mxu0 0.0
    %148 = vmatpush1.msra.mxu0 0.0
    %149 = vmatprep.subr.mxu0 0.0
    %150 = vmatpush1.msra.mxu0 0.0
    %151 = vmatprep.subr.mxu0 0.0
    %152 = vmatpush1.msra.mxu0 0.0
    %153 = vmatprep.subr.mxu0 0.0
    %154 = vmatpush1.msra.mxu0 0.0
    %155 = vmatprep.subr.mxu0 0.0
    %156 = vmatpush1.msra.mxu0 0.0
    %157 = vmatprep.subr.mxu0 0.0
    %158 = vmatpush1.msra.mxu0 0.0
    %159 = vmatprep.subr.mxu0 0.0
    %160 = vmatpush1.msra.mxu0 0.0
    %161 = vmatprep.subr.mxu0 0.0
    %162 = vmatpush1.msra.mxu0 0.0
    %163 = vmatprep.mubr.f32.mxu0 0.0
    %164 = vmatmul.mubr.f32.gmra.mrb[0].mxu0 %v97
    %v165 = vpop.f32.mrb[0].mxu0
    %v166 = vadd.f32 %v93, %v165
    %v167 = vpop.f32.mrb[0].mxu0
    %168 = vdwg.mxu0
    %v169 = vmax.f32 %v166, 0.0
    %v170 = vld [vmem:[#allocation7] sm:$0xff]
    %v171 = vld [vmem:[#allocation7 + $0x8] sm:$0xff]
    %v172 = vld [vmem:[#allocation7 + $0x10] sm:$0xff]
    %v173 = vld [vmem:[#allocation7 + $0x18] sm:$0xff]
    %v174 = vld [vmem:[%s4] sm:$0x1]
    %v176 = vlaneseq
    %v177 = vshrl.u32 %v176, 7
    %v178 = vsub.s32 0, %v177
    %v179 = vrot.slane %v174, %v178
    %v182 = vsel %vm95, %v169, 0
    %184 = vmatprep.subr.mxu0 0.0
    %185 = vmatpush1.msra.mxu0 %v170
    %186 = vmatprep.subr.mxu0 0.0
    %187 = vmatpush1.msra.mxu0 %v171
    %188 = vmatprep.subr.mxu0 0.0
    %189 = vmatpush1.msra.mxu0 %v172
    %190 = vmatprep.subr.mxu0 0.0
    %191 = vmatpush1.msra.mxu0 %v173
    %192 = vmatprep.subr.mxu0 0.0
    %193 = vmatpush1.msra.mxu0 0.0
    %194 = vmatprep.subr.mxu0 0.0
    %195 = vmatpush1.msra.mxu0 0.0
    %196 = vmatprep.subr.mxu0 0.0
    %197 = vmatpush1.msra.mxu0 0.0
    %198 = vmatprep.subr.mxu0 0.0
    %199 = vmatpush1.msra.mxu0 0.0
    %200 = vmatprep.subr.mxu0 0.0
    %201 = vmatpush1.msra.mxu0 0.0
    %202 = vmatprep.subr.mxu0 0.0
    %203 = vmatpush1.msra.mxu0 0.0
    %204 = vmatprep.subr.mxu0 0.0
    %205 = vmatpush1.msra.mxu0 0.0
    %206 = vmatprep.subr.mxu0 0.0
    %207 = vmatpush1.msra.mxu0 0.0
    %208 = vmatprep.subr.mxu0 0.0
    %209 = vmatpush1.msra.mxu0 0.0
    %210 = vmatprep.subr.mxu0 0.0
    %211 = vmatpush1.msra.mxu0 0.0
    %212 = vmatprep.subr.mxu0 0.0
    %213 = vmatpush1.msra.mxu0 0.0
    %214 = vmatprep.subr.mxu0 0.0
    %215 = vmatpush1.msra.mxu0 0.0
    %216 = vmatprep.subr.mxu0 0.0
    %217 = vmatpush1.msra.mxu0 0.0
    %218 = vmatprep.subr.mxu0 0.0
    %219 = vmatpush1.msra.mxu0 0.0
    %220 = vmatprep.subr.mxu0 0.0
    %221 = vmatpush1.msra.mxu0 0.0
    %222 = vmatprep.subr.mxu0 0.0
    %223 = vmatpush1.msra.mxu0 0.0
    %224 = vmatprep.subr.mxu0 0.0
    %225 = vmatpush1.msra.mxu0 0.0
    %226 = vmatprep.subr.mxu0 0.0
    %227 = vmatpush1.msra.mxu0 0.0
    %228 = vmatprep.subr.mxu0 0.0
    %229 = vmatpush1.msra.mxu0 0.0
    %230 = vmatprep.subr.mxu0 0.0
    %231 = vmatpush1.msra.mxu0 0.0
    %232 = vmatprep.subr.mxu0 0.0
    %233 = vmatpush1.msra.mxu0 0.0
    %234 = vmatprep.subr.mxu0 0.0
    %235 = vmatpush1.msra.mxu0 0.0
    %236 = vmatprep.subr.mxu0 0.0
    %237 = vmatpush1.msra.mxu0 0.0
    %238 = vmatprep.subr.mxu0 0.0
    %239 = vmatpush1.msra.mxu0 0.0
    %240 = vmatprep.subr.mxu0 0.0
    %241 = vmatpush1.msra.mxu0 0.0
    %242 = vmatprep.subr.mxu0 0.0
    %243 = vmatpush1.msra.mxu0 0.0
    %244 = vmatprep.subr.mxu0 0.0
    %245 = vmatpush1.msra.mxu0 0.0
    %246 = vmatprep.subr.mxu0 0.0
    %247 = vmatpush1.msra.mxu0 0.0
    %248 = vmatprep.mubr.f32.mxu0 0.0
    %249 = vmatmul.mubr.f32.gmra.mrb[0].mxu0 %v182
    %v250 = vpop.f32.mrb[0].mxu0
    %v251 = vadd.f32 %v179, %v250
    %v252 = vpop.f32.mrb[0].mxu0
    %253 = vdwg.mxu0
    %v254 = vmax.f32 %v251, 0.0
    %v255 = vld [vmem:[#allocation8] sm:$0xff]
    %v256 = vld [vmem:[#allocation8 + $0x8] sm:$0xff]
    %v257 = vld [vmem:[#allocation8 + $0x10] sm:$0xff]
    %v258 = vld [vmem:[#allocation8 + $0x18] sm:$0xff]
    %v259 = vld [vmem:[#allocation8 + $0x20] sm:$0xff]
    %v260 = vld [vmem:[#allocation8 + $0x28] sm:$0xff]
    %v261 = vld [vmem:[#allocation8 + $0x30] sm:$0xff]
    %v262 = vld [vmem:[#allocation8 + $0x38] sm:$0xff]
    %v263 = vld [vmem:[%s6] sm:$0x3]
    %v265 = vlaneseq
    %v266 = vshrl.u32 %v265, 7
    %v267 = vsub.s32 0, %v266
    %v268 = vrot.slane %v263, %v267
    %v269 = vlaneseq
    %v270 = vshrl.u32 %v269, 7
    %v271 = vsub.s32 1, %v270
    %v272 = vrot.slane %v263, %v271
    %v276 = vsel %vm95, %v254, 0
    %278 = vmatprep.subr.mxu0 %v256
    %279 = vmatpush1.msra.mxu0 %v255
    %280 = vmatprep.subr.mxu0 %v258
    %281 = vmatpush1.msra.mxu0 %v257
    %282 = vmatprep.subr.mxu0 %v260
    %283 = vmatpush1.msra.mxu0 %v259
    %284 = vmatprep.subr.mxu0 %v262
    %285 = vmatpush1.msra.mxu0 %v261
    %286 = vmatprep.subr.mxu0 0.0
    %287 = vmatpush1.msra.mxu0 0.0
    %288 = vmatprep.subr.mxu0 0.0
    %289 = vmatpush1.msra.mxu0 0.0
    %290 = vmatprep.subr.mxu0 0.0
    %291 = vmatpush1.msra.mxu0 0.0
    %292 = vmatprep.subr.mxu0 0.0
    %293 = vmatpush1.msra.mxu0 0.0
    %294 = vmatprep.subr.mxu0 0.0
    %295 = vmatpush1.msra.mxu0 0.0
    %296 = vmatprep.subr.mxu0 0.0
    %297 = vmatpush1.msra.mxu0 0.0
    %298 = vmatprep.subr.mxu0 0.0
    %299 = vmatpush1.msra.mxu0 0.0
    %300 = vmatprep.subr.mxu0 0.0
    %301 = vmatpush1.msra.mxu0 0.0
    %302 = vmatprep.subr.mxu0 0.0
    %303 = vmatpush1.msra.mxu0 0.0
    %304 = vmatprep.subr.mxu0 0.0
    %305 = vmatpush1.msra.mxu0 0.0
    %306 = vmatprep.subr.mxu0 0.0
    %307 = vmatpush1.msra.mxu0 0.0
    %308 = vmatprep.subr.mxu0 0.0
    %309 = vmatpush1.msra.mxu0 0.0
    %310 = vmatprep.subr.mxu0 0.0
    %311 = vmatpush1.msra.mxu0 0.0
    %312 = vmatprep.subr.mxu0 0.0
    %313 = vmatpush1.msra.mxu0 0.0
    %314 = vmatprep.subr.mxu0 0.0
    %315 = vmatpush1.msra.mxu0 0.0
    %316 = vmatprep.subr.mxu0 0.0
    %317 = vmatpush1.msra.mxu0 0.0
    %318 = vmatprep.subr.mxu0 0.0
    %319 = vmatpush1.msra.mxu0 0.0
    %320 = vmatprep.subr.mxu0 0.0
    %321 = vmatpush1.msra.mxu0 0.0
    %322 = vmatprep.subr.mxu0 0.0
    %323 = vmatpush1.msra.mxu0 0.0
    %324 = vmatprep.subr.mxu0 0.0
    %325 = vmatpush1.msra.mxu0 0.0
    %326 = vmatprep.subr.mxu0 0.0
    %327 = vmatpush1.msra.mxu0 0.0
    %328 = vmatprep.subr.mxu0 0.0
    %329 = vmatpush1.msra.mxu0 0.0
    %330 = vmatprep.subr.mxu0 0.0
    %331 = vmatpush1.msra.mxu0 0.0
    %332 = vmatprep.subr.mxu0 0.0
    %333 = vmatpush1.msra.mxu0 0.0
    %334 = vmatprep.subr.mxu0 0.0
    %335 = vmatpush1.msra.mxu0 0.0
    %336 = vmatprep.subr.mxu0 0.0
    %337 = vmatpush1.msra.mxu0 0.0
    %338 = vmatprep.subr.mxu0 0.0
    %339 = vmatpush1.msra.mxu0 0.0
    %340 = vmatprep.subr.mxu0 0.0
    %341 = vmatpush1.msra.mxu0 0.0
    %342 = vmatprep.mubr.f32.mxu0 0.0
    %343 = vmatmul.mubr.f32.gmra.mrb[0].mxu0 %v276
    %v344 = vpop.f32.mrb[0].mxu0
    %v345 = vadd.f32 %v268, %v344
    %v346 = vpop.f32.mrb[0].mxu0
    %v347 = vadd.f32 %v272, %v346
    %348 = vdwg.mxu0
    %v349 = vmax.f32 %v347, -20.0
    %v350 = vmin.f32 %v349, 2.0
    %v351 = vmul.f32 %v350, 1.442695
    %v352 = vpow.pop %v351
    %v353 = vld [vmem:[%s7] sm:$0xff]
    %v354 = vmul.f32 %v352, %v353
    %v355 = vadd.f32 %v345, %v354
    %v356 = vmul.f32 %v353, %v353
    %v357 = vtanh.pop %v355
    %v358 = vmul.f32 %v356, -0.5
    %v359 = vsub.f32 %v358, %v350
    %v360 = vsub.f32 %v359, 0.9189385
    %v361 = vsub.f32 0.6931472, %v355
    %v362 = vmul.f32 %v355, -2.0
    %v363 = vmax.f32 %v362, 0.0
    %vm364 = vcmp.ne.f32.partialorder %v362, %v362
    %v365 = vadd.f32 %v362, 0.0
    %v366 = vand.u32 2147483647, %v362
    %v367 = vsub.f32 0.0, %v366
    %v368 = vmul.f32 %v367, 1.442695
    %v369 = vpow.pop %v368
    %v370 = vadd.f32 %v369, 1.0
    %v371 = vlog2.pop %v370
    %v372 = vmul.f32 %v371, 0.6931472
    %v373 = vmul.f32 -0.5, %v369
    %v374 = vadd.f32 %v373, 1.0
    %v375 = vmul.f32 %v374, %v369
    %v376 = vand.u32 2147483647, %v369
    %vm377 = vcmp.lt.f32.partialorder %v376, 0.0004427343
    %v378 = vsel %vm377, %v375, %v372
    %v379 = vadd.f32 %v363, %v378
    %v380 = vsel %vm364, %v365, %v379
    %v381 = vsub.f32 %v361, %v380
    %v382 = vmul.f32 %v381, 2.0
    %v383 = vlaneseq
    %v384 = vand.u32 %v383, 127
    %vm385 = vcmp.lt.s32.totalorder %v384, 8
    %v386 = vsub.f32 %v360, %v382
    %v387 = vsel %vm385, %v386, 0.0
    %388 = vadd.xlane.f32.xlu0 %v387
    %v389 = vpop.xlane.xlu0 %388
    %vm390 = vcmp.eq.s32.totalorder %v384, 8
    %v391 = vsel %vm385, %v357, 0.0
    %v392 = vsel %vm390, %v389, %v391
    %393 = vst [vmem:[#allocation10] sm:$0xff] %v392
    // Predicated region
    $region50: #{tpu_custom_call.1} parent=1 // pred_check
      _
    $region51: #{tpu_custom_call.1} parent=1 // pred_check_branch
      %395 = sbr.rel (0) target = $region53
    $region52: #{tpu_custom_call.1} parent=1 // pred_region
      %s397 = ssub.s32 128, 128
      %398 = vsyncadd [#allocation4], %s397
      %s400 = sshll.u32 [#allocation10], 4
      %s401 = int_to_ptr.vmem [resolvable:$true] %s400
      %403 = dma.vmem_to_hbm [thread:$0]  %s401, 128, %s8, [#allocation4]
    $region53: #{tpu_custom_call.1} parent=1 // pred_fallthru
      _
    // Predicated region
    $region54: #{tpu_custom_call.1} parent=1 // pred_check
      _
    $region55: #{tpu_custom_call.1} parent=1 // pred_check_branch
      %405 = sbr.rel (0) target = $region57
    $region56: #{tpu_custom_call.1} parent=1 // pred_region
      %406 = dma.done [#allocation4], 128
    $region57: #{tpu_custom_call.1} parent=1 // pred_fallthru
      _
    %407 = vsyncpa [#allocation3], 1
    %408 = vsyncpa [#allocation6], 1
    %409 = vsyncpa [#allocation9], 1
    %410 = vsyncpa [#allocation4], 1

// kernel: tpu_custom_call.1
$region0: #{tpu_custom_call.1}
  #allocation0 [shape = 'u32[]', space=smem, size = 0x4, offset = 0x4, fixed_abs, tag = 'smem constant byte address 0x4 - core index']
  #allocation1 [shape = 'u32[144,128]{1,0:T(1,128)}', space=vmem, size = 0x12000, scoped, tag = 'internal scratch']
  %s0 = inlined_call_operand.hbm [shape: f32[8,32], index: 0, kind: input, shape index: {}]
  %s1 = inlined_call_operand.hbm [shape: f32[32,32], index: 1, kind: input, shape index: {}]
  %s2 = inlined_call_operand.vmem [shape: f32[1,32], index: 2, kind: input, shape index: {}]
  %s3 = inlined_call_operand.hbm [shape: f32[32,32], index: 3, kind: input, shape index: {}]
  %s4 = inlined_call_operand.vmem [shape: f32[1,32], index: 4, kind: input, shape index: {}]
  %s5 = inlined_call_operand.hbm [shape: f32[32,256], index: 5, kind: input, shape index: {}]
  %s6 = inlined_call_operand.vmem [shape: f32[1,256], index: 6, kind: input, shape index: {}]
  %s7 = inlined_call_operand.vmem [shape: f32[8,128], index: 7, kind: input, shape index: {}]
  %s8 = inlined_call_operand.hbm [shape: f32[8,128], index: 8, kind: output, shape index: {}]
  %s9 = sld [smem:[#allocation0]]
  $region58: #{tpu_custom_call.1} parent=0
    _
  %s11 = ssub.s32 1, %s9
  %s12 = scalar_select 0, %s11, %s9
  $region1: #{tpu_custom_call.1} parent=0
    #allocation2 [shape = 'u8[4096]{0}', space=vmem, size = 0x1000, scoped, tag = 'input window, operand 0, single buffered']
    #allocation3 [shape = 's32[1]{0}', space=sflag, size = 0x4, scoped, tag = 'scoped memory for tpu_custom_call.1']
    #allocation4 [shape = 's32[1]{0}', space=sflag, size = 0x4, scoped, tag = 'scoped memory for tpu_custom_call.1']
    #allocation5 [shape = 'u8[16384]{0}', space=vmem, size = 0x4000, scoped, tag = 'input window, operand 1, single buffered']
    #allocation6 [shape = 's32[1]{0}', space=sflag, size = 0x4, scoped, tag = 'scoped memory for tpu_custom_call.1']
    #allocation7 [shape = 'u8[16384]{0}', space=vmem, size = 0x4000, scoped, tag = 'input window, operand 3, single buffered']
    #allocation8 [shape = 'u8[32768]{0}', space=vmem, size = 0x8000, scoped, tag = 'input window, operand 5, single buffered']
    #allocation9 [shape = 's32[1]{0}', space=sflag, size = 0x4, scoped, tag = 'scoped memory for tpu_custom_call.1']
    #allocation10 [shape = 'u8[4096]{0}', space=vmem, size = 0x1000, scoped, tag = 'output window, operand 0, single buffered']
    %13 = vsyncpa [#allocation3], 0
    %14 = vsyncpa [#allocation6], 0
    %15 = vsyncpa [#allocation9], 0
    %16 = vsyncpa [#allocation4], 0
    // Predicated region
    $region2: #{tpu_custom_call.1} parent=1 // pred_check
      _
    $region3: #{tpu_custom_call.1} parent=1 // pred_check_branch
      %18 = sbr.rel (0) target = $region5
    $region4: #{tpu_custom_call.1} parent=1 // pred_region
      %s20 = ssub.s32 128, 128
      %21 = vsyncadd [#allocation3], %s20
      %s23 = sshll.u32 [#allocation2], 4
      %s24 = int_to_ptr.vmem [resolvable:$true] %s23
      %26 = dma.hbm_to_vmem [thread:$0]  %s0, 128, %s24, [#allocation3]
    $region5: #{tpu_custom_call.1} parent=1 // pred_fallthru
      _
    // Predicated region
    $region6: #{tpu_custom_call.1} parent=1 // pred_check
      _
    $region7: #{tpu_custom_call.1} parent=1 // pred_check_branch
      %28 = sbr.rel (0) target = $region9
    $region8: #{tpu_custom_call.1} parent=1 // pred_region
      %s30 = ssub.s32 512, 512
      %31 = vsyncadd [#allocation6], %s30
      %s32 = sshll.u32 [#allocation5], 4
      %s33 = int_to_ptr.vmem [resolvable:$true] %s32
      %38 = dma.hbm_to_vmem [thread:$0]  %s1, 512, %s33, [#allocation6], 128, 128, 8
    $region9: #{tpu_custom_call.1} parent=1 // pred_fallthru
      _
    // Predicated region
    $region10: #{tpu_custom_call.1} parent=1 // pred_check
      _
    $region11: #{tpu_custom_call.1} parent=1 // pred_check_branch
      %40 = sbr.rel (0) target = $region13
    $region12: #{tpu_custom_call.1} parent=1 // pred_region
      _
    $region13: #{tpu_custom_call.1} parent=1 // pred_fallthru
      _
    // Predicated region
    $region14: #{tpu_custom_call.1} parent=1 // pred_check
      _
    $region15: #{tpu_custom_call.1} parent=1 // pred_check_branch
      %42 = sbr.rel (0) target = $region17
    $region16: #{tpu_custom_call.1} parent=1 // pred_region
      %s44 = ssub.s32 512, 512
      %45 = vsyncadd [#allocation6], %s44
      %s46 = sshll.u32 [#allocation7], 4
      %s47 = int_to_ptr.vmem [resolvable:$true] %s46
      %52 = dma.hbm_to_vmem [thread:$0]  %s3, 512, %s47, [#allocation6], 128, 128, 8
    $region17: #{tpu_custom_call.1} parent=1 // pred_fallthru
      _
    // Predicated region
    $region18: #{tpu_custom_call.1} parent=1 // pred_check
      _
    $region19: #{tpu_custom_call.1} parent=1 // pred_check_branch
      %54 = sbr.rel (0) target = $region21
    $region20: #{tpu_custom_call.1} parent=1 // pred_region
      _
    $region21: #{tpu_custom_call.1} parent=1 // pred_fallthru
      _
    // Predicated region
    $region22: #{tpu_custom_call.1} parent=1 // pred_check
      _
    $region23: #{tpu_custom_call.1} parent=1 // pred_check_branch
      %56 = sbr.rel (0) target = $region25
    $region24: #{tpu_custom_call.1} parent=1 // pred_region
      %s58 = ssub.s32 1024, 1024
      %59 = vsyncadd [#allocation9], %s58
      %s60 = sshll.u32 [#allocation8], 4
      %s61 = int_to_ptr.vmem [resolvable:$true] %s60
      %66 = dma.hbm_to_vmem [thread:$0]  %s5, 1024, %s61, [#allocation9], 256, 256, 16
    $region25: #{tpu_custom_call.1} parent=1 // pred_fallthru
      _
    // Predicated region
    $region26: #{tpu_custom_call.1} parent=1 // pred_check
      _
    $region27: #{tpu_custom_call.1} parent=1 // pred_check_branch
      %68 = sbr.rel (0) target = $region29
    $region28: #{tpu_custom_call.1} parent=1 // pred_region
      _
    $region29: #{tpu_custom_call.1} parent=1 // pred_fallthru
      _
    // Predicated region
    $region30: #{tpu_custom_call.1} parent=1 // pred_check
      _
    $region31: #{tpu_custom_call.1} parent=1 // pred_check_branch
      %70 = sbr.rel (0) target = $region33
    $region32: #{tpu_custom_call.1} parent=1 // pred_region
      _
    $region33: #{tpu_custom_call.1} parent=1 // pred_fallthru
      _
    // Predicated region
    $region34: #{tpu_custom_call.1} parent=1 // pred_check
      _
    $region35: #{tpu_custom_call.1} parent=1 // pred_check_branch
      %72 = sbr.rel (0) target = $region37
    $region36: #{tpu_custom_call.1} parent=1 // pred_region
      %73 = dma.done [#allocation3], 128
    $region37: #{tpu_custom_call.1} parent=1 // pred_fallthru
      _
    // Predicated region
    $region38: #{tpu_custom_call.1} parent=1 // pred_check
      _
    $region39: #{tpu_custom_call.1} parent=1 // pred_check_branch
      %75 = sbr.rel (0) target = $region41
    $region40: #{tpu_custom_call.1} parent=1 // pred_region
      %76 = dma.done [#allocation6], 512
    $region41: #{tpu_custom_call.1} parent=1 // pred_fallthru
      _
    // Predicated region
    $region42: #{tpu_custom_call.1} parent=1 // pred_check
      _
    $region43: #{tpu_custom_call.1} parent=1 // pred_check_branch
      %78 = sbr.rel (0) target = $region45
    $region44: #{tpu_custom_call.1} parent=1 // pred_region
      %79 = dma.done [#allocation6], 512
    $region45: #{tpu_custom_call.1} parent=1 // pred_fallthru
      _
    // Predicated region
    $region46: #{tpu_custom_call.1} parent=1 // pred_check
      _
    $region47: #{tpu_custom_call.1} parent=1 // pred_check_branch
      %81 = sbr.rel (0) target = $region49
    $region48: #{tpu_custom_call.1} parent=1 // pred_region
      %82 = dma.done [#allocation9], 1024
    $region49: #{tpu_custom_call.1} parent=1 // pred_fallthru
      _
    %v83 = vld [vmem:[#allocation2] sm:$0xff]
    %v84 = vld [vmem:[#allocation5] sm:$0xff]
    %v85 = vld [vmem:[#allocation5 + $0x8] sm:$0xff]
    %v86 = vld [vmem:[#allocation5 + $0x10] sm:$0xff]
    %v87 = vld [vmem:[#allocation5 + $0x18] sm:$0xff]
    %v88 = vld [vmem:[%s2] sm:$0x1]
    %v90 = vlaneseq
    %v91 = vshrl.u32 %v90, 7
    %v92 = vsub.s32 0, %v91
    %v93 = vrot.slane %v88, %v92
    %vm95 = vcmask 261120
    %v97 = vsel %vm95, %v83, 0
    %99 = vmatprep.subr.mxu0 0.0
    %100 = vmatpush1.msra.mxu0 %v84
    %101 = vmatprep.subr.mxu0 0.0
    %102 = vmatpush1.msra.mxu0 %v85
    %103 = vmatprep.subr.mxu0 0.0
    %104 = vmatpush1.msra.mxu0 %v86
    %105 = vmatprep.subr.mxu0 0.0
    %106 = vmatpush1.msra.mxu0 %v87
    %107 = vmatprep.subr.mxu0 0.0
    %108 = vmatpush1.msra.mxu0 0.0
    %109 = vmatprep.subr.mxu0 0.0
    %110 = vmatpush1.msra.mxu0 0.0
    %111 = vmatprep.subr.mxu0 0.0
    %112 = vmatpush1.msra.mxu0 0.0
    %113 = vmatprep.subr.mxu0 0.0
    %114 = vmatpush1.msra.mxu0 0.0
    %115 = vmatprep.subr.mxu0 0.0
    %116 = vmatpush1.msra.mxu0 0.0
    %117 = vmatprep.subr.mxu0 0.0
    %118 = vmatpush1.msra.mxu0 0.0
    %119 = vmatprep.subr.mxu0 0.0
    %120 = vmatpush1.msra.mxu0 0.0
    %121 = vmatprep.subr.mxu0 0.0
    %122 = vmatpush1.msra.mxu0 0.0
    %123 = vmatprep.subr.mxu0 0.0
    %124 = vmatpush1.msra.mxu0 0.0
    %125 = vmatprep.subr.mxu0 0.0
    %126 = vmatpush1.msra.mxu0 0.0
    %127 = vmatprep.subr.mxu0 0.0
    %128 = vmatpush1.msra.mxu0 0.0
    %129 = vmatprep.subr.mxu0 0.0
    %130 = vmatpush1.msra.mxu0 0.0
    %131 = vmatprep.subr.mxu0 0.0
    %132 = vmatpush1.msra.mxu0 0.0
    %133 = vmatprep.subr.mxu0 0.0
    %134 = vmatpush1.msra.mxu0 0.0
    %135 = vmatprep.subr.mxu0 0.0
    %136 = vmatpush1.msra.mxu0 0.0
    %137 = vmatprep.subr.mxu0 0.0
    %138 = vmatpush1.msra.mxu0 0.0
    %139 = vmatprep.subr.mxu0 0.0
    %140 = vmatpush1.msra.mxu0 0.0
    %141 = vmatprep.subr.mxu0 0.0
    %142 = vmatpush1.msra.mxu0 0.0
    %143 = vmatprep.subr.mxu0 0.0
    %144 = vmatpush1.msra.mxu0 0.0
    %145 = vmatprep.subr.mxu0 0.0
    %146 = vmatpush1.msra.mxu0 0.0
    %147 = vmatprep.subr.mxu0 0.0
    %148 = vmatpush1.msra.mxu0 0.0
    %149 = vmatprep.subr.mxu0 0.0
    %150 = vmatpush1.msra.mxu0 0.0
    %151 = vmatprep.subr.mxu0 0.0
    %152 = vmatpush1.msra.mxu0 0.0
    %153 = vmatprep.subr.mxu0 0.0
    %154 = vmatpush1.msra.mxu0 0.0
    %155 = vmatprep.subr.mxu0 0.0
    %156 = vmatpush1.msra.mxu0 0.0
    %157 = vmatprep.subr.mxu0 0.0
    %158 = vmatpush1.msra.mxu0 0.0
    %159 = vmatprep.subr.mxu0 0.0
    %160 = vmatpush1.msra.mxu0 0.0
    %161 = vmatprep.subr.mxu0 0.0
    %162 = vmatpush1.msra.mxu0 0.0
    %163 = vmatprep.mubr.f32.mxu0 0.0
    %164 = vmatmul.mubr.f32.gmra.mrb[0].mxu0 %v97
    %v165 = vpop.f32.mrb[0].mxu0
    %v166 = vadd.f32 %v93, %v165
    %v167 = vpop.f32.mrb[0].mxu0
    %168 = vdwg.mxu0
    %v169 = vmax.f32 %v166, 0.0
    %v170 = vld [vmem:[#allocation7] sm:$0xff]
    %v171 = vld [vmem:[#allocation7 + $0x8] sm:$0xff]
    %v172 = vld [vmem:[#allocation7 + $0x10] sm:$0xff]
    %v173 = vld [vmem:[#allocation7 + $0x18] sm:$0xff]
    %v174 = vld [vmem:[%s4] sm:$0x1]
    %v176 = vlaneseq
    %v177 = vshrl.u32 %v176, 7
    %v178 = vsub.s32 0, %v177
    %v179 = vrot.slane %v174, %v178
    %v182 = vsel %vm95, %v169, 0
    %184 = vmatprep.subr.mxu0 0.0
    %185 = vmatpush1.msra.mxu0 %v170
    %186 = vmatprep.subr.mxu0 0.0
    %187 = vmatpush1.msra.mxu0 %v171
    %188 = vmatprep.subr.mxu0 0.0
    %189 = vmatpush1.msra.mxu0 %v172
    %190 = vmatprep.subr.mxu0 0.0
    %191 = vmatpush1.msra.mxu0 %v173
    %192 = vmatprep.subr.mxu0 0.0
    %193 = vmatpush1.msra.mxu0 0.0
    %194 = vmatprep.subr.mxu0 0.0
    %195 = vmatpush1.msra.mxu0 0.0
    %196 = vmatprep.subr.mxu0 0.0
    %197 = vmatpush1.msra.mxu0 0.0
    %198 = vmatprep.subr.mxu0 0.0
    %199 = vmatpush1.msra.mxu0 0.0
    %200 = vmatprep.subr.mxu0 0.0
    %201 = vmatpush1.msra.mxu0 0.0
    %202 = vmatprep.subr.mxu0 0.0
    %203 = vmatpush1.msra.mxu0 0.0
    %204 = vmatprep.subr.mxu0 0.0
    %205 = vmatpush1.msra.mxu0 0.0
    %206 = vmatprep.subr.mxu0 0.0
    %207 = vmatpush1.msra.mxu0 0.0
    %208 = vmatprep.subr.mxu0 0.0
    %209 = vmatpush1.msra.mxu0 0.0
    %210 = vmatprep.subr.mxu0 0.0
    %211 = vmatpush1.msra.mxu0 0.0
    %212 = vmatprep.subr.mxu0 0.0
    %213 = vmatpush1.msra.mxu0 0.0
    %214 = vmatprep.subr.mxu0 0.0
    %215 = vmatpush1.msra.mxu0 0.0
    %216 = vmatprep.subr.mxu0 0.0
    %217 = vmatpush1.msra.mxu0 0.0
    %218 = vmatprep.subr.mxu0 0.0
    %219 = vmatpush1.msra.mxu0 0.0
    %220 = vmatprep.subr.mxu0 0.0
    %221 = vmatpush1.msra.mxu0 0.0
    %222 = vmatprep.subr.mxu0 0.0
    %223 = vmatpush1.msra.mxu0 0.0
    %224 = vmatprep.subr.mxu0 0.0
    %225 = vmatpush1.msra.mxu0 0.0
    %226 = vmatprep.subr.mxu0 0.0
    %227 = vmatpush1.msra.mxu0 0.0
    %228 = vmatprep.subr.mxu0 0.0
    %229 = vmatpush1.msra.mxu0 0.0
    %230 = vmatprep.subr.mxu0 0.0
    %231 = vmatpush1.msra.mxu0 0.0
    %232 = vmatprep.subr.mxu0 0.0
    %233 = vmatpush1.msra.mxu0 0.0
    %234 = vmatprep.subr.mxu0 0.0
    %235 = vmatpush1.msra.mxu0 0.0
    %236 = vmatprep.subr.mxu0 0.0
    %237 = vmatpush1.msra.mxu0 0.0
    %238 = vmatprep.subr.mxu0 0.0
    %239 = vmatpush1.msra.mxu0 0.0
    %240 = vmatprep.subr.mxu0 0.0
    %241 = vmatpush1.msra.mxu0 0.0
    %242 = vmatprep.subr.mxu0 0.0
    %243 = vmatpush1.msra.mxu0 0.0
    %244 = vmatprep.subr.mxu0 0.0
    %245 = vmatpush1.msra.mxu0 0.0
    %246 = vmatprep.subr.mxu0 0.0
    %247 = vmatpush1.msra.mxu0 0.0
    %248 = vmatprep.mubr.f32.mxu0 0.0
    %249 = vmatmul.mubr.f32.gmra.mrb[0].mxu0 %v182
    %v250 = vpop.f32.mrb[0].mxu0
    %v251 = vadd.f32 %v179, %v250
    %v252 = vpop.f32.mrb[0].mxu0
    %253 = vdwg.mxu0
    %v254 = vmax.f32 %v251, 0.0
    %v255 = vld [vmem:[#allocation8] sm:$0xff]
    %v256 = vld [vmem:[#allocation8 + $0x8] sm:$0xff]
    %v257 = vld [vmem:[#allocation8 + $0x10] sm:$0xff]
    %v258 = vld [vmem:[#allocation8 + $0x18] sm:$0xff]
    %v259 = vld [vmem:[#allocation8 + $0x20] sm:$0xff]
    %v260 = vld [vmem:[#allocation8 + $0x28] sm:$0xff]
    %v261 = vld [vmem:[#allocation8 + $0x30] sm:$0xff]
    %v262 = vld [vmem:[#allocation8 + $0x38] sm:$0xff]
    %v263 = vld [vmem:[%s6] sm:$0x3]
    %v265 = vlaneseq
    %v266 = vshrl.u32 %v265, 7
    %v267 = vsub.s32 0, %v266
    %v268 = vrot.slane %v263, %v267
    %v269 = vlaneseq
    %v270 = vshrl.u32 %v269, 7
    %v271 = vsub.s32 1, %v270
    %v272 = vrot.slane %v263, %v271
    %v276 = vsel %vm95, %v254, 0
    %278 = vmatprep.subr.mxu0 %v256
    %279 = vmatpush1.msra.mxu0 %v255
    %280 = vmatprep.subr.mxu0 %v258
    %281 = vmatpush1.msra.mxu0 %v257
    %282 = vmatprep.subr.mxu0 %v260
    %283 = vmatpush1.msra.mxu0 %v259
    %284 = vmatprep.subr.mxu0 %v262
    %285 = vmatpush1.msra.mxu0 %v261
    %286 = vmatprep.subr.mxu0 0.0
    %287 = vmatpush1.msra.mxu0 0.0
    %288 = vmatprep.subr.mxu0 0.0
    %289 = vmatpush1.msra.mxu0 0.0
    %290 = vmatprep.subr.mxu0 0.0
    %291 = vmatpush1.msra.mxu0 0.0
    %292 = vmatprep.subr.mxu0 0.0
    %293 = vmatpush1.msra.mxu0 0.0
    %294 = vmatprep.subr.mxu0 0.0
    %295 = vmatpush1.msra.mxu0 0.0
    %296 = vmatprep.subr.mxu0 0.0
    %297 = vmatpush1.msra.mxu0 0.0
    %298 = vmatprep.subr.mxu0 0.0
    %299 = vmatpush1.msra.mxu0 0.0
    %300 = vmatprep.subr.mxu0 0.0
    %301 = vmatpush1.msra.mxu0 0.0
    %302 = vmatprep.subr.mxu0 0.0
    %303 = vmatpush1.msra.mxu0 0.0
    %304 = vmatprep.subr.mxu0 0.0
    %305 = vmatpush1.msra.mxu0 0.0
    %306 = vmatprep.subr.mxu0 0.0
    %307 = vmatpush1.msra.mxu0 0.0
    %308 = vmatprep.subr.mxu0 0.0
    %309 = vmatpush1.msra.mxu0 0.0
    %310 = vmatprep.subr.mxu0 0.0
    %311 = vmatpush1.msra.mxu0 0.0
    %312 = vmatprep.subr.mxu0 0.0
    %313 = vmatpush1.msra.mxu0 0.0
    %314 = vmatprep.subr.mxu0 0.0
    %315 = vmatpush1.msra.mxu0 0.0
    %316 = vmatprep.subr.mxu0 0.0
    %317 = vmatpush1.msra.mxu0 0.0
    %318 = vmatprep.subr.mxu0 0.0
    %319 = vmatpush1.msra.mxu0 0.0
    %320 = vmatprep.subr.mxu0 0.0
    %321 = vmatpush1.msra.mxu0 0.0
    %322 = vmatprep.subr.mxu0 0.0
    %323 = vmatpush1.msra.mxu0 0.0
    %324 = vmatprep.subr.mxu0 0.0
    %325 = vmatpush1.msra.mxu0 0.0
    %326 = vmatprep.subr.mxu0 0.0
    %327 = vmatpush1.msra.mxu0 0.0
    %328 = vmatprep.subr.mxu0 0.0
    %329 = vmatpush1.msra.mxu0 0.0
    %330 = vmatprep.subr.mxu0 0.0
    %331 = vmatpush1.msra.mxu0 0.0
    %332 = vmatprep.subr.mxu0 0.0
    %333 = vmatpush1.msra.mxu0 0.0
    %334 = vmatprep.subr.mxu0 0.0
    %335 = vmatpush1.msra.mxu0 0.0
    %336 = vmatprep.subr.mxu0 0.0
    %337 = vmatpush1.msra.mxu0 0.0
    %338 = vmatprep.subr.mxu0 0.0
    %339 = vmatpush1.msra.mxu0 0.0
    %340 = vmatprep.subr.mxu0 0.0
    %341 = vmatpush1.msra.mxu0 0.0
    %342 = vmatprep.mubr.f32.mxu0 0.0
    %343 = vmatmul.mubr.f32.gmra.mrb[0].mxu0 %v276
    %v344 = vpop.f32.mrb[0].mxu0
    %v345 = vadd.f32 %v268, %v344
    %v346 = vpop.f32.mrb[0].mxu0
    %v347 = vadd.f32 %v272, %v346
    %348 = vdwg.mxu0
    %v349 = vmax.f32 %v347, -20.0
    %v350 = vmin.f32 %v349, 2.0
    %v351 = vmul.f32 %v350, 1.442695
    %v352 = vpow.pop %v351
    %v353 = vld [vmem:[%s7] sm:$0xff]
    %v354 = vmul.f32 %v352, %v353
    %v355 = vadd.f32 %v345, %v354
    %v356 = vmul.f32 %v353, %v353
    %v357 = vtanh.pop %v355
    %v358 = vmul.f32 %v356, -0.5
    %v359 = vsub.f32 %v358, %v350
    %v360 = vsub.f32 %v359, 0.9189385
    %v361 = vsub.f32 0.6931472, %v355
    %v362 = vmul.f32 %v355, -2.0
    %v363 = vmax.f32 %v362, 0.0
    %vm364 = vcmp.ne.f32.partialorder %v362, %v362
    %v365 = vadd.f32 %v362, 0.0
    %v366 = vand.u32 2147483647, %v362
    %v367 = vsub.f32 0.0, %v366
    %v368 = vmul.f32 %v367, 1.442695
    %v369 = vpow.pop %v368
    %v370 = vadd.f32 %v369, 1.0
    %v371 = vlog2.pop %v370
    %v372 = vmul.f32 %v371, 0.6931472
    %v373 = vmul.f32 -0.5, %v369
    %v374 = vadd.f32 %v373, 1.0
    %v375 = vmul.f32 %v374, %v369
    %v376 = vand.u32 2147483647, %v369
    %vm377 = vcmp.lt.f32.partialorder %v376, 0.0004427343
    %v378 = vsel %vm377, %v375, %v372
    %v379 = vadd.f32 %v363, %v378
    %v380 = vsel %vm364, %v365, %v379
    %v381 = vsub.f32 %v361, %v380
    %v382 = vmul.f32 %v381, 2.0
    %v383 = vlaneseq
    %v384 = vand.u32 %v383, 127
    %vm385 = vcmp.lt.s32.totalorder %v384, 8
    %v386 = vsub.f32 %v360, %v382
    %v387 = vsel %vm385, %v386, 0.0
    %388 = vadd.xlane.f32.xlu0 %v387
    %v389 = vpop.xlane.xlu0 %388
    %vm390 = vcmp.eq.s32.totalorder %v384, 8
    %v391 = vsel %vm385, %v357, 0.0
    %v392 = vsel %vm390, %v389, %v391
    %393 = vst [vmem:[#allocation10] sm:$0xff] %v392
    // Predicated region
    $region50: #{tpu_custom_call.1} parent=1 // pred_check
      _
    $region51: #{tpu_custom_call.1} parent=1 // pred_check_branch
      %395 = sbr.rel (0) target = $region53
    $region52: #{tpu_custom_call.1} parent=1 // pred_region
      %s397 = ssub.s32 128, 128
      %398 = vsyncadd [#allocation4], %s397
      %s400 = sshll.u32 [#allocation10], 4
      %s401 = int_to_ptr.vmem [resolvable:$true] %s400
      %403 = dma.vmem_to_hbm [thread:$0]  %s401, 128, %s8, [#allocation4]
    $region53: #{tpu_custom_call.1} parent=1 // pred_fallthru
      _
    // Predicated region
    $region54: #{tpu_custom_call.1} parent=1 // pred_check
      _
    $region55: #{tpu_custom_call.1} parent=1 // pred_check_branch
      %405 = sbr.rel (0) target = $region57
    $region56: #{tpu_custom_call.1} parent=1 // pred_region
      %406 = dma.done [#allocation4], 128
    $region57: #{tpu_custom_call.1} parent=1 // pred_fallthru
      _
    %407 = vsyncpa [#allocation3], 1
    %408 = vsyncpa [#allocation6], 1
    %409 = vsyncpa [#allocation9], 1
    %410 = vsyncpa [#allocation4], 1

</llo_original>
